<compile_context>
chip_gen: v7x
topology: tpu7x:2x2x1
jax: 0.10.0
libtpu: 0.0.40
codegen_flags: <defaults>
</compile_context>

<pallas_src>
import functools

import jax
import jax.numpy as jnp
from jax.experimental import pallas as pl
from jax.experimental.pallas import tpu as pltpu


def _round_up(v, m):
    return (v + m - 1) // m * m


def _cheby_kan_kernel(x_ref, w_ref, b_ref, o_ref, *, degree):
    # x_ref : (bm, I)            input tile
    # w_ref : (degree * I, bo)   fused coefficient block (degrees 1..degree)
    # b_ref : (1, bo)            degree-0 bias row
    # o_ref : (bm, bo)           output tile
    xt = jnp.tanh(x_ref[...].astype(jnp.float32))          # (bm, I), in (-1, 1)

    # Chebyshev recurrence: T_1 = x, T_d = 2 x T_{d-1} - T_{d-2}.  (T_0 == 1 is
    # folded into the bias.)  degree is small and static -> fully unrolled.
    ts = [xt]
    t_prev = jnp.ones_like(xt)
    t_curr = xt
    for _ in range(2, degree + 1):
        t_next = 2.0 * xt * t_curr - t_prev
        ts.append(t_next)
        t_prev, t_curr = t_curr, t_next

    # Fused LHS: (bm, degree * I), column order matches W's row order
    # (degree-major, then input index).
    t = jnp.concatenate(ts, axis=-1).astype(w_ref.dtype)

    acc = jnp.dot(t, w_ref[...], preferred_element_type=jnp.float32)
    acc = acc + b_ref[...].astype(jnp.float32)              # broadcast (1, bo)
    o_ref[...] = acc.astype(o_ref.dtype)


def cheby_kan_layer(x, cheby_coeffs, *, block_batch=512, block_out=None):
    """ChebyKANLayer forward.

    x            : any shape reshapeable to (-1, input_dim)
    cheby_coeffs : (input_dim, output_dim, degree + 1)
    returns      : (batch, output_dim), dtype of x
    """
    input_dim, output_dim, deg_p1 = cheby_coeffs.shape
    degree = deg_p1 - 1

    x2d = x.reshape(-1, input_dim)
    batch = x2d.shape[0]
    out_dtype = x2d.dtype

    # degree == 0: output is batch-independent (T_0 == 1) -> just the bias row.
    if degree == 0:
        bias = jnp.sum(cheby_coeffs[:, :, 0].astype(jnp.float32), axis=0)
        return jnp.broadcast_to(bias, (batch, output_dim)).astype(out_dtype)

    # --- tiling -------------------------------------------------------------
    bm = _round_up(min(block_batch, _round_up(batch, 8)), 8)
    padded_batch = _round_up(batch, bm)

    if block_out is None:
        bo = _round_up(output_dim, 128)
    else:
        bo = _round_up(min(block_out, _round_up(output_dim, 128)), 128)
    padded_out = _round_up(output_dim, bo)

    # --- parameter preprocessing (done once, outside the kernel) ------------
    # bf16 x bf16 MXU matmul when both inputs are bf16; f32 otherwise.
    if x2d.dtype == jnp.bfloat16 and cheby_coeffs.dtype == jnp.bfloat16:
        mm_dtype = jnp.bfloat16
    else:
        mm_dtype = jnp.float32

    cf32 = cheby_coeffs.astype(jnp.float32)
    # Degrees 1..degree -> fused RHS of shape (degree * I, O_pad).
    w = jnp.transpose(cf32[:, :, 1:], (2, 0, 1)).reshape(
        degree * input_dim, output_dim)
    w = jnp.pad(w, ((0, 0), (0, padded_out - output_dim))).astype(mm_dtype)
    # Degree 0 (T_0 == 1) -> bias row (kept in f32 for accumulation accuracy).
    bias = jnp.sum(cf32[:, :, 0], axis=0).reshape(1, output_dim)
    bias = jnp.pad(bias, ((0, 0), (0, padded_out - output_dim)))

    if padded_batch != batch:
        x2d = jnp.pad(x2d, ((0, padded_batch - batch), (0, 0)))

    k_fused = degree * input_dim
    grid = (padded_batch // bm, padded_out // bo)

    # VMEM budget estimate (double-buffered pipeline buffers + live values).
    est = (2 * (bm * input_dim + bm * bo + bo) * 4
           + 2 * k_fused * bo * jnp.dtype(mm_dtype).itemsize
           + (bm * k_fused + bm * bo) * 4)
    vmem_limit = int(min(max(2 * est + (8 << 20), 32 << 20), 48 << 20))

    kernel = functools.partial(_cheby_kan_kernel, degree=degree)

    # NOTE: the coefficient / bias blocks have constant index maps, so the
    # pipeline only fetches them once; single-buffering them via
    # pipeline_mode=pl.Buffered(1) would additionally halve their resident
    # footprint on v7x's 64 MiB VMEM (no benefit at these test sizes).
    y = pl.pallas_call(
        kernel,
        out_shape=jax.ShapeDtypeStruct((padded_batch, padded_out), out_dtype),
        grid_spec=pltpu.PrefetchScalarGridSpec(
            num_scalar_prefetch=0,
            grid=grid,
            in_specs=[
                pl.BlockSpec((bm, input_dim), lambda i, j: (i, 0)),
                pl.BlockSpec((k_fused, bo), lambda i, j: (0, j)),
                pl.BlockSpec((1, bo), lambda i, j: (0, j)),
            ],
            out_specs=pl.BlockSpec((bm, bo), lambda i, j: (i, j)),
        ),
        compiler_params=pltpu.CompilerParams(
            dimension_semantics=("parallel", "parallel"),
            vmem_limit_bytes=vmem_limit),
    )(x2d, w, bias)

    return y[:batch, :output_dim]


def cheby_kan_reference(x, cheby_coeffs):
    """Pure-JAX reference mirroring the PyTorch forward literally."""
    input_dim, output_dim, deg_p1 = cheby_coeffs.shape
    x2d = x.reshape(-1, input_dim).astype(jnp.float32)
    xt = jnp.tanh(x2d)
    xe = jnp.broadcast_to(xt[:, :, None], (x2d.shape[0], input_dim, deg_p1))
    theta = jnp.arccos(jnp.clip(xe, -1.0, 1.0))
    arange = jnp.arange(0, deg_p1, dtype=jnp.float32)
    t = jnp.cos(theta * arange)
    y = jnp.einsum("bid,iod->bo", t, cheby_coeffs.astype(jnp.float32))
    return y


if __name__ == "__main__":
    # Small deterministic config.
    input_dim, output_dim, degree = 8, 16, 3

    key = jax.random.PRNGKey(0)
    kx1, kx2, kc = jax.random.split(key, 3)

    # Parameter init: normal(mean=0, std=1/(input_dim*(degree+1))), (I, O, D+1).
    std = 1.0 / (input_dim * (degree + 1))
    cheby_coeffs = std * jax.random.normal(
        kc, (input_dim, output_dim, degree + 1), dtype=jnp.float32)

    # Test 1: batch aligned to 8.
    x1 = jax.random.normal(kx1, (16, input_dim), dtype=jnp.float32)
    y1 = jax.block_until_ready(cheby_kan_layer(x1, cheby_coeffs))
    y1_ref = cheby_kan_reference(x1, cheby_coeffs)
    assert y1.shape == (16, output_dim)
    assert jnp.allclose(y1, y1_ref, atol=1e-5, rtol=1e-5), "mismatch (batch=16)"

    # Test 2: ragged batch (exercises the zero-pad + slice path).
    x2 = jax.random.normal(kx2, (37, input_dim), dtype=jnp.float32)
    y2 = jax.block_until_ready(cheby_kan_layer(x2, cheby_coeffs))
    y2_ref = cheby_kan_reference(x2, cheby_coeffs)
    assert y2.shape == (37, output_dim)
    assert jnp.allclose(y2, y2_ref, atol=1e-5, rtol=1e-5), "mismatch (batch=37)"

    print("KERNEL_OK")
</pallas_src>

<mosaic_0001>
module attributes {stable_mosaic.version = 11 : i64} {
  func.func @_cheby_kan_kernel(%arg0: i32, %arg1: i32, %arg2: memref<16x8xf32, #tpu.memory_space<vmem>>, %arg3: memref<24x128xf32, #tpu.memory_space<vmem>>, %arg4: memref<1x128xf32, #tpu.memory_space<vmem>>, %arg5: memref<16x128xf32, #tpu.memory_space<vmem>>) attributes {dimension_semantics = [#tpu.dimension_semantics<parallel>, #tpu.dimension_semantics<parallel>], iteration_bounds = array<i64: 1, 1>, scalar_prefetch = 0 : i64, scratch_operands = 0 : i64, tpu.core_type = #tpu.core_type<tc>, window_params = [{transform_indices = @transform_0, window_bounds = array<i64: 16, 8>}, {transform_indices = @transform_1, window_bounds = array<i64: 24, 128>}, {transform_indices = @transform_2, window_bounds = array<i64: 1, 128>}, {transform_indices = @transform_3, window_bounds = array<i64: 16, 128>}]} {
    %c0 = arith.constant 0 : index
    %c0_0 = arith.constant 0 : index
    %0 = vector.load %arg2[%c0, %c0_0] : memref<16x8xf32, #tpu.memory_space<vmem>>, vector<16x8xf32>
    %1 = math.tanh %0 : vector<16x8xf32>
    %cst = arith.constant 1.000000e+00 : f32
    %2 = vector.broadcast %cst : f32 to vector<16x8xf32>
    %cst_1 = arith.constant 2.000000e+00 : f32
    %3 = vector.broadcast %cst_1 : f32 to vector<16x8xf32>
    %4 = arith.mulf %3, %1 : vector<16x8xf32>
    %5 = arith.mulf %4, %1 : vector<16x8xf32>
    %6 = arith.subf %5, %2 : vector<16x8xf32>
    %cst_2 = arith.constant 2.000000e+00 : f32
    %7 = vector.broadcast %cst_2 : f32 to vector<16x8xf32>
    %8 = arith.mulf %7, %1 : vector<16x8xf32>
    %9 = arith.mulf %8, %6 : vector<16x8xf32>
    %10 = arith.subf %9, %1 : vector<16x8xf32>
    %11 = tpu.concatenate %1, %6, %10 in 1 : vector<16x8xf32>, vector<16x8xf32>, vector<16x8xf32> -> vector<16x24xf32>
    %c0_3 = arith.constant 0 : index
    %c0_4 = arith.constant 0 : index
    %12 = vector.load %arg3[%c0_3, %c0_4] : memref<24x128xf32, #tpu.memory_space<vmem>>, vector<24x128xf32>
    %cst_5 = arith.constant dense<0.000000e+00> : vector<16x128xf32>
    %13 = tpu.matmul %11, %12, %cst_5 {dimension_numbers = #tpu.dot_dimension_numbers<[1], [0], [0], [1], [0, 0, 1, 1], [], []>} : vector<16x24xf32>, vector<24x128xf32>, vector<16x128xf32> -> vector<16x128xf32>
    %c0_6 = arith.constant 0 : index
    %c0_7 = arith.constant 0 : index
    %14 = vector.load %arg4[%c0_6, %c0_7] : memref<1x128xf32, #tpu.memory_space<vmem>>, vector<1x128xf32>
    %15 = vector.broadcast %14 : vector<1x128xf32> to vector<16x128xf32>
    %16 = arith.addf %13, %15 : vector<16x128xf32>
    %c0_8 = arith.constant 0 : index
    %c0_9 = arith.constant 0 : index
    %17 = vector.load %arg5[%c0_8, %c0_9] : memref<16x128xf32, #tpu.memory_space<vmem>>, vector<16x128xf32>
    tpu.vector_store %arg5[%c0_8, %c0_9], %16 {strides = array<i32>} : memref<16x128xf32, #tpu.memory_space<vmem>>, vector<16x128xf32>,
    return
  }
  func.func @transform_0(%arg0: i32, %arg1: i32) -> (i32, i32) {
    %c0_i32 = arith.constant 0 : i32
    %c0_i32_0 = arith.constant 0 : i32
    return %arg0, %c0_i32 : i32, i32
  }
  func.func @transform_1(%arg0: i32, %arg1: i32) -> (i32, i32) {
    %c0_i32 = arith.constant 0 : i32
    %c0_i32_0 = arith.constant 0 : i32
    return %c0_i32, %arg1 : i32, i32
  }
  func.func @transform_2(%arg0: i32, %arg1: i32) -> (i32, i32) {
    %c0_i32 = arith.constant 0 : i32
    %c0_i32_0 = arith.constant 0 : i32
    return %c0_i32, %arg1 : i32, i32
  }
  func.func @transform_3(%arg0: i32, %arg1: i32) -> (i32, i32) {
    %c0_i32 = arith.constant 0 : i32
    return %arg0, %arg1 : i32, i32
  }
}

</mosaic_0001>

<llo_original>
// kernel: tpu_custom_call.1
$region0: #{tpu_custom_call.1}
  #allocation0 [shape = 'u32[]', space=smem, size = 0x4, offset = 0x4, fixed_abs, tag = 'smem constant byte address 0x4 - core index']
  #allocation1 [shape = 'u32[144,128]{1,0:T(1,128)}', space=vmem, size = 0x12000, scoped, tag = 'internal scratch']
  %s0 = inlined_call_operand.vmem [shape: f32[16,8], index: 0, kind: input, shape index: {}]
  %s1 = inlined_call_operand.vmem [shape: f32[24,128], index: 1, kind: input, shape index: {}]
  %s2 = inlined_call_operand.vmem [shape: f32[1,128], index: 2, kind: input, shape index: {}]
  %s3 = inlined_call_operand.hbm [shape: f32[16,128], index: 3, kind: output, shape index: {}]
  %s4 = sld [smem:[#allocation0]]
  $region22: #{tpu_custom_call.1} parent=0
    _
  %s6 = ssub.s32 1, %s4
  %s7 = scalar_select 0, %s6, %s4
  $region1: #{tpu_custom_call.1} parent=0
    #allocation2 [shape = 'u8[8192]{0}', space=vmem, size = 0x2000, scoped, tag = 'output window, operand 0, single buffered']
    #allocation3 [shape = 's32[1]{0}', space=sflag, size = 0x4, scoped, tag = 'scoped memory for tpu_custom_call.1']
    %8 = vsyncpa [#allocation3], 0
    // Predicated region
    $region2: #{tpu_custom_call.1} parent=1 // pred_check
      _
    $region3: #{tpu_custom_call.1} parent=1 // pred_check_branch
      %10 = sbr.rel (0) target = $region5
    $region4: #{tpu_custom_call.1} parent=1 // pred_region
      _
    $region5: #{tpu_custom_call.1} parent=1 // pred_fallthru
      _
    // Predicated region
    $region6: #{tpu_custom_call.1} parent=1 // pred_check
      _
    $region7: #{tpu_custom_call.1} parent=1 // pred_check_branch
      %12 = sbr.rel (0) target = $region9
    $region8: #{tpu_custom_call.1} parent=1 // pred_region
      _
    $region9: #{tpu_custom_call.1} parent=1 // pred_fallthru
      _
    // Predicated region
    $region10: #{tpu_custom_call.1} parent=1 // pred_check
      _
    $region11: #{tpu_custom_call.1} parent=1 // pred_check_branch
      %14 = sbr.rel (0) target = $region13
    $region12: #{tpu_custom_call.1} parent=1 // pred_region
      _
    $region13: #{tpu_custom_call.1} parent=1 // pred_fallthru
      _
    %v15 = vld [vmem:[%s0] sm:$0xff]
    %v16 = vld [vmem:[%s0 + $0x8] sm:$0xff]
    %v17 = vtanh.pop %v15
    %v18 = vtanh.pop %v16
    %v19 = vmul.f32 %v17, 2.0
    %v20 = vmul.f32 %v18, 2.0
    %v21 = vmul.f32 %v19, %v17
    %v22 = vmul.f32 %v20, %v18
    %v23 = vsub.f32 %v21, 1.0
    %v24 = vsub.f32 %v22, 1.0
    %v25 = vmul.f32 %v19, %v23
    %v26 = vmul.f32 %v20, %v24
    %v27 = vsub.f32 %v25, %v17
    %v28 = vsub.f32 %v26, %v18
    %31 = vrot.lane.b32.xlu0 %v23, 8
    %v32 = vpop.permute.xlu0 %31
    %33 = vrot.lane.b32.xlu0 %v24, 8
    %v34 = vpop.permute.xlu0 %33
    %39 = vrot.lane.b32.xlu0 %v27, 16
    %v40 = vpop.permute.xlu0 %39
    %41 = vrot.lane.b32.xlu0 %v28, 16
    %v42 = vpop.permute.xlu0 %41
    %vm45 = vcmask 64512
    %v46 = vsel %vm45, %v17, %v32
    %v47 = vsel %vm45, %v18, %v34
    %vm48 = vcmask 130048
    %v49 = vsel %vm48, %v46, %v40
    %v50 = vsel %vm48, %v47, %v42
    %v51 = vld [vmem:[%s1] sm:$0xff]
    %v52 = vld [vmem:[%s1 + $0x8] sm:$0xff]
    %v53 = vld [vmem:[%s1 + $0x10] sm:$0xff]
    %v54 = vld [vmem:[%s2] sm:$0x1]
    %v56 = vlaneseq
    %v57 = vshrl.u32 %v56, 7
    %v58 = vsub.s32 0, %v57
    %v59 = vrot.slane %v54, %v58
    %vm61 = vcmask 195584
    %v63 = vsel %vm61, %v49, 0
    %v66 = vsel %vm61, %v50, 0
    %68 = vmatprep.subr.mxu0 0.0
    %69 = vmatpush1.msra.mxu0 %v51
    %70 = vmatprep.subr.mxu0 0.0
    %71 = vmatpush1.msra.mxu0 %v52
    %72 = vmatprep.subr.mxu0 0.0
    %73 = vmatpush1.msra.mxu0 %v53
    %74 = vmatprep.subr.mxu0 0.0
    %75 = vmatpush1.msra.mxu0 0.0
    %76 = vmatprep.subr.mxu0 0.0
    %77 = vmatpush1.msra.mxu0 0.0
    %78 = vmatprep.subr.mxu0 0.0
    %79 = vmatpush1.msra.mxu0 0.0
    %80 = vmatprep.subr.mxu0 0.0
    %81 = vmatpush1.msra.mxu0 0.0
    %82 = vmatprep.subr.mxu0 0.0
    %83 = vmatpush1.msra.mxu0 0.0
    %84 = vmatprep.subr.mxu0 0.0
    %85 = vmatpush1.msra.mxu0 0.0
    %86 = vmatprep.subr.mxu0 0.0
    %87 = vmatpush1.msra.mxu0 0.0
    %88 = vmatprep.subr.mxu0 0.0
    %89 = vmatpush1.msra.mxu0 0.0
    %90 = vmatprep.subr.mxu0 0.0
    %91 = vmatpush1.msra.mxu0 0.0
    %92 = vmatprep.subr.mxu0 0.0
    %93 = vmatpush1.msra.mxu0 0.0
    %94 = vmatprep.subr.mxu0 0.0
    %95 = vmatpush1.msra.mxu0 0.0
    %96 = vmatprep.subr.mxu0 0.0
    %97 = vmatpush1.msra.mxu0 0.0
    %98 = vmatprep.subr.mxu0 0.0
    %99 = vmatpush1.msra.mxu0 0.0
    %100 = vmatprep.subr.mxu0 0.0
    %101 = vmatpush1.msra.mxu0 0.0
    %102 = vmatprep.subr.mxu0 0.0
    %103 = vmatpush1.msra.mxu0 0.0
    %104 = vmatprep.subr.mxu0 0.0
    %105 = vmatpush1.msra.mxu0 0.0
    %106 = vmatprep.subr.mxu0 0.0
    %107 = vmatpush1.msra.mxu0 0.0
    %108 = vmatprep.subr.mxu0 0.0
    %109 = vmatpush1.msra.mxu0 0.0
    %110 = vmatprep.subr.mxu0 0.0
    %111 = vmatpush1.msra.mxu0 0.0
    %112 = vmatprep.subr.mxu0 0.0
    %113 = vmatpush1.msra.mxu0 0.0
    %114 = vmatprep.subr.mxu0 0.0
    %115 = vmatpush1.msra.mxu0 0.0
    %116 = vmatprep.subr.mxu0 0.0
    %117 = vmatpush1.msra.mxu0 0.0
    %118 = vmatprep.subr.mxu0 0.0
    %119 = vmatpush1.msra.mxu0 0.0
    %120 = vmatprep.subr.mxu0 0.0
    %121 = vmatpush1.msra.mxu0 0.0
    %122 = vmatprep.subr.mxu0 0.0
    %123 = vmatpush1.msra.mxu0 0.0
    %124 = vmatprep.subr.mxu0 0.0
    %125 = vmatpush1.msra.mxu0 0.0
    %126 = vmatprep.subr.mxu0 0.0
    %127 = vmatpush1.msra.mxu0 0.0
    %128 = vmatprep.subr.mxu0 0.0
    %129 = vmatpush1.msra.mxu0 0.0
    %130 = vmatprep.subr.mxu0 0.0
    %131 = vmatpush1.msra.mxu0 0.0
    %132 = vmatprep.mubr.f32.mxu0 0.0
    %133 = vmatmul.mubr.f32.gmra.mrb[0].mxu0 %v63
    %v134 = vpop.f32.mrb[0].mxu0
    %v135 = vadd.f32 %v59, %v134
    %v136 = vpop.f32.mrb[0].mxu0
    %137 = vmatprep.mubr.f32.mxu0 0.0
    %138 = vmatmul.mubr.f32.gmra.mrb[0].mxu0 %v66
    %v139 = vpop.f32.mrb[0].mxu0
    %v140 = vadd.f32 %v59, %v139
    %v141 = vpop.f32.mrb[0].mxu0
    %142 = vdwg.mxu0
    %143 = vst [vmem:[#allocation2] sm:$0xff] %v135
    %144 = vst [vmem:[#allocation2 + $0x8] sm:$0xff] %v140
    // Predicated region
    $region14: #{tpu_custom_call.1} parent=1 // pred_check
      _
    $region15: #{tpu_custom_call.1} parent=1 // pred_check_branch
      %146 = sbr.rel (0) target = $region17
    $region16: #{tpu_custom_call.1} parent=1 // pred_region
      %s148 = ssub.s32 256, 256
      %149 = vsyncadd [#allocation3], %s148
      %s150 = sshll.u32 [#allocation2], 4
      %s151 = int_to_ptr.vmem [resolvable:$true] %s150
      %156 = dma.vmem_to_hbm [thread:$0]  %s151, 256, %s3, [#allocation3], 128, 128, 8
    $region17: #{tpu_custom_call.1} parent=1 // pred_fallthru
      _
    // Predicated region
    $region18: #{tpu_custom_call.1} parent=1 // pred_check
      _
    $region19: #{tpu_custom_call.1} parent=1 // pred_check_branch
      %158 = sbr.rel (0) target = $region21
    $region20: #{tpu_custom_call.1} parent=1 // pred_region
      %159 = dma.done [#allocation3], 256
    $region21: #{tpu_custom_call.1} parent=1 // pred_fallthru
      _
    %160 = vsyncpa [#allocation3], 1

</llo_original>
